<compile_context>
chip_gen: v7x
topology: tpu7x:2x2x1
jax: 0.10.0
libtpu: 0.0.40
codegen_flags: <defaults>
</compile_context>

<pallas_src>
import math

import jax
import jax.numpy as jnp
from jax.experimental import pallas as pl
from jax.experimental.pallas import tpu as pltpu


def bert_intermediate_kernel(x_ref, w_ref, b_ref, o_ref):
    # MXU matmul with f32 accumulation: [tm, H] @ [H, tn] -> [tm, tn]
    h = jnp.dot(x_ref[...], w_ref[...], preferred_element_type=jnp.float32)
    h = h + b_ref[...].astype(jnp.float32)  # broadcast bias [1, tn]
    # "Original BERT" gelu: x * 0.5 * (1 + erf(x / sqrt(2)))  (exact, matches spec)
    g = h * 0.5 * (1.0 + jax.lax.erf(h * (1.0 / math.sqrt(2.0))))
    o_ref[...] = g.astype(o_ref.dtype)


def _vmem_need(row_tile, tn, H, xb, wb, ob):
    """Bytes of VMEM this tiling needs (double-buffered tiles + f32 temporaries)."""
    x_t = row_tile * H * xb
    w_t = H * tn * wb
    b_t = tn * 4
    o_t = row_tile * tn * ob
    f32_tmp = 2 * row_tile * tn * 4  # dot result + GELU temp in f32
    return 2 * (x_t + w_t + b_t + o_t) + f32_tmp


def _pick_row_tile(M, tm):
    if M <= tm:
        return ((M + 7) // 8) * 8  # single sublane-aligned tile
    # Prefer a reasonably large divisor of M (multiple of 8) so the wrapper
    # never has to jnp.pad (extra HBM read+write of x); otherwise pad to tm.
    for cand in range(tm, max(tm // 4, 64) - 1, -8):
        if M % cand == 0:
            return cand
    return tm


def _pick_col_tile(I, row_tile, H, xb, wb, ob, cap):
    """Largest column tile (full I preferred, else lane-dense divisor) fitting `cap`."""
    cands = [I] + [c for c in (4096, 3072, 2048, 1536, 1024, 512, 256, 128)
                   if c < I and I % c == 0]
    for tn in cands:
        if _vmem_need(row_tile, tn, H, xb, wb, ob) <= cap:
            return tn
    return cands[-1]


def bert_intermediate(hidden_states, weight, bias, *, tm=512,
                      compute_dtype=jnp.bfloat16):
    """hidden_states: [B, S, H]; weight: [H, I]; bias: [I]  ->  [B, S, I]"""
    B, S, H = hidden_states.shape
    I = weight.shape[1]
    M = B * S

    out_dtype = hidden_states.dtype
    x2d = hidden_states.reshape(M, H)
    w2d = weight
    if compute_dtype is not None:
        # Cast in the wrapper: bf16 MXU path + half the HBM/VMEM bytes for x, w.
        x2d = x2d.astype(compute_dtype)
        w2d = w2d.astype(compute_dtype)
    b2d = bias.astype(jnp.float32).reshape(1, I)

    xb = jnp.dtype(x2d.dtype).itemsize
    wb = jnp.dtype(w2d.dtype).itemsize
    ob = jnp.dtype(out_dtype).itemsize

    # ---- VMEM cap derived from physical capacity (v7x = 64 MiB) + headroom. ----
    try:
        phys_vmem = int(pltpu.get_tpu_info().vmem_capacity_bytes)
    except Exception:
        phys_vmem = 64 << 20  # conservative (v7x) if query unavailable
    vmem_cap = min(int(phys_vmem * 3 // 4), 100 << 20)

    # ---- Row tile (avoid padding when a divisor exists). ----
    row_tile = _pick_row_tile(M, tm)
    m_pad = pl.cdiv(M, row_tile) * row_tile
    if m_pad != M:
        x2d = jnp.pad(x2d, ((0, m_pad - M), (0, 0)))

    # ---- Column tile: full I (weight fully resident) if it fits, else 128-dense. ----
    tn = _pick_col_tile(I, row_tile, H, xb, wb, ob, vmem_cap)

    n_i = m_pad // row_tile  # M tiles (inner grid axis)
    n_j = I // tn            # I tiles (outer axis -> each weight slab DMA'd once)

    vmem_limit = min(max(_vmem_need(row_tile, tn, H, xb, wb, ob) + (4 << 20),
                         32 << 20), vmem_cap)

    cost = pl.CostEstimate(
        flops=2 * M * H * I,
        transcendentals=M * I,
        bytes_accessed=(n_j * m_pad * H * xb + H * I * wb + I * 4 + m_pad * I * ob),
    )

    out2d = pl.pallas_call(
        bert_intermediate_kernel,
        out_shape=jax.ShapeDtypeStruct((m_pad, I), out_dtype),
        grid_spec=pltpu.PrefetchScalarGridSpec(
            num_scalar_prefetch=0,
            grid=(n_j, n_i),  # j (I tiles) outer, i (M tiles) inner
            in_specs=[
                pl.BlockSpec((row_tile, H), lambda j, i: (i, 0)),  # x tile
                pl.BlockSpec((H, tn), lambda j, i: (0, j)),        # weight slab
                pl.BlockSpec((1, tn), lambda j, i: (0, j)),        # bias slab
            ],
            out_specs=pl.BlockSpec((row_tile, tn), lambda j, i: (i, j)),
        ),
        compiler_params=pltpu.CompilerParams(
            dimension_semantics=("parallel", "parallel"),
            vmem_limit_bytes=int(vmem_limit),
        ),
        cost_estimate=cost,
    )(x2d, w2d, b2d)

    if m_pad != M:
        out2d = out2d[:M]
    return out2d.reshape(B, S, I)


def reference(hidden_states, weight, bias, compute_dtype=None):
    x, w = hidden_states, weight
    if compute_dtype is not None:
        x = x.astype(compute_dtype)
        w = w.astype(compute_dtype)
    h = jnp.einsum("bsh,hi->bsi", x, w,
                   preferred_element_type=jnp.float32) + bias.astype(jnp.float32)
    g = h * 0.5 * (1.0 + jax.lax.erf(h / math.sqrt(2.0)))
    return g.astype(hidden_states.dtype)


if __name__ == "__main__":
    # Small config: batch=2, seq=8, hidden=32, intermediate=128 (4*hidden)
    B, S, H, I = 2, 8, 32, 128

    key = jax.random.PRNGKey(0)
    kx, kw, kb = jax.random.split(key, 3)

    x = jax.random.normal(kx, (B, S, H), dtype=jnp.float32)
    # nn.Linear(H, I): torch weight is [I, H]; stored here transposed as [H, I].
    w = jax.random.normal(kw, (H, I), dtype=jnp.float32) * (1.0 / math.sqrt(H))
    b = jax.random.normal(kb, (I,), dtype=jnp.float32) * 0.02

    out = jax.block_until_ready(bert_intermediate(x, w, b))

    ref_bf16 = reference(x, w, b, compute_dtype=jnp.bfloat16)  # same-dtype path
    ref_f32 = reference(x, w, b)                               # exact-erf f32 spec

    assert out.shape == (B, S, I)
    assert jnp.allclose(out, ref_bf16, atol=2e-3, rtol=2e-3), "mismatch vs bf16 reference"
    assert jnp.allclose(out, ref_f32, atol=3e-2, rtol=3e-2), "mismatch vs f32 reference"

    print("KERNEL_OK")
</pallas_src>

<mosaic_0001>
module attributes {stable_mosaic.version = 11 : i64} {
  func.func @bert_intermediate_kernel(%arg0: i32, %arg1: i32, %arg2: memref<16x32xbf16, #tpu.memory_space<vmem>>, %arg3: memref<32x128xbf16, #tpu.memory_space<vmem>>, %arg4: memref<1x128xf32, #tpu.memory_space<vmem>>, %arg5: memref<16x128xf32, #tpu.memory_space<vmem>>) attributes {dimension_semantics = [#tpu.dimension_semantics<parallel>, #tpu.dimension_semantics<parallel>], iteration_bounds = array<i64: 1, 1>, scalar_prefetch = 0 : i64, scratch_operands = 0 : i64, tpu.core_type = #tpu.core_type<tc>, window_params = [{transform_indices = @transform_0, window_bounds = array<i64: 16, 32>}, {transform_indices = @transform_1, window_bounds = array<i64: 32, 128>}, {transform_indices = @transform_2, window_bounds = array<i64: 1, 128>}, {transform_indices = @transform_3, window_bounds = array<i64: 16, 128>}]} {
    %c0 = arith.constant 0 : index
    %c0_0 = arith.constant 0 : index
    %0 = vector.load %arg2[%c0, %c0_0] : memref<16x32xbf16, #tpu.memory_space<vmem>>, vector<16x32xbf16>
    %c0_1 = arith.constant 0 : index
    %c0_2 = arith.constant 0 : index
    %1 = vector.load %arg3[%c0_1, %c0_2] : memref<32x128xbf16, #tpu.memory_space<vmem>>, vector<32x128xbf16>
    %cst = arith.constant dense<0.000000e+00> : vector<16x128xf32>
    %2 = tpu.matmul %0, %1, %cst {dimension_numbers = #tpu.dot_dimension_numbers<[1], [0], [0], [1], [0, 0, 1, 1], [], []>} : vector<16x32xbf16>, vector<32x128xbf16>, vector<16x128xf32> -> vector<16x128xf32>
    %c0_3 = arith.constant 0 : index
    %c0_4 = arith.constant 0 : index
    %3 = vector.load %arg4[%c0_3, %c0_4] : memref<1x128xf32, #tpu.memory_space<vmem>>, vector<1x128xf32>
    %4 = vector.broadcast %3 : vector<1x128xf32> to vector<16x128xf32>
    %5 = arith.addf %2, %4 : vector<16x128xf32>
    %cst_5 = arith.constant 5.000000e-01 : f32
    %6 = vector.broadcast %cst_5 : f32 to vector<16x128xf32>
    %7 = arith.mulf %5, %6 : vector<16x128xf32>
    %cst_6 = arith.constant 0.707106769 : f32
    %8 = vector.broadcast %cst_6 : f32 to vector<16x128xf32>
    %9 = arith.mulf %5, %8 : vector<16x128xf32>
    %10 = math.erf %9 : vector<16x128xf32>
    %cst_7 = arith.constant 1.000000e+00 : f32
    %11 = vector.broadcast %cst_7 : f32 to vector<16x128xf32>
    %12 = arith.addf %11, %10 : vector<16x128xf32>
    %13 = arith.mulf %7, %12 : vector<16x128xf32>
    %c0_8 = arith.constant 0 : index
    %c0_9 = arith.constant 0 : index
    %14 = vector.load %arg5[%c0_8, %c0_9] : memref<16x128xf32, #tpu.memory_space<vmem>>, vector<16x128xf32>
    tpu.vector_store %arg5[%c0_8, %c0_9], %13 {strides = array<i32>} : memref<16x128xf32, #tpu.memory_space<vmem>>, vector<16x128xf32>,
    return
  }
  func.func @transform_0(%arg0: i32, %arg1: i32) -> (i32, i32) {
    %c0_i32 = arith.constant 0 : i32
    %c0_i32_0 = arith.constant 0 : i32
    return %arg1, %c0_i32 : i32, i32
  }
  func.func @transform_1(%arg0: i32, %arg1: i32) -> (i32, i32) {
    %c0_i32 = arith.constant 0 : i32
    %c0_i32_0 = arith.constant 0 : i32
    return %c0_i32, %arg0 : i32, i32
  }
  func.func @transform_2(%arg0: i32, %arg1: i32) -> (i32, i32) {
    %c0_i32 = arith.constant 0 : i32
    %c0_i32_0 = arith.constant 0 : i32
    return %c0_i32, %arg0 : i32, i32
  }
  func.func @transform_3(%arg0: i32, %arg1: i32) -> (i32, i32) {
    %c0_i32 = arith.constant 0 : i32
    return %arg1, %arg0 : i32, i32
  }
}

</mosaic_0001>

<llo_original>
// kernel: tpu_custom_call.1
$region0: #{tpu_custom_call.1}
  #allocation0 [shape = 'u32[]', space=smem, size = 0x4, offset = 0x4, fixed_abs, tag = 'smem constant byte address 0x4 - core index']
  #allocation1 [shape = 'u32[144,128]{1,0:T(1,128)}', space=vmem, size = 0x12000, scoped, tag = 'internal scratch']
  %s0 = inlined_call_operand.hbm [shape: bf16[16,32], index: 0, kind: input, shape index: {}]
  %s1 = inlined_call_operand.hbm [shape: bf16[32,128], index: 1, kind: input, shape index: {}]
  %s2 = inlined_call_operand.vmem [shape: f32[1,128], index: 2, kind: input, shape index: {}]
  %s3 = inlined_call_operand.hbm [shape: f32[16,128], index: 3, kind: output, shape index: {}]
  %s4 = sld [smem:[#allocation0]]
  $region30: #{tpu_custom_call.1} parent=0
    _
  %s6 = ssub.s32 1, %s4
  %s7 = scalar_select 0, %s6, %s4
  $region1: #{tpu_custom_call.1} parent=0
    #allocation2 [shape = 'u8[4096]{0}', space=vmem, size = 0x1000, scoped, tag = 'input window, operand 0, single buffered']
    #allocation3 [shape = 's32[1]{0}', space=sflag, size = 0x4, scoped, tag = 'scoped memory for tpu_custom_call.1']
    #allocation4 [shape = 's32[1]{0}', space=sflag, size = 0x4, scoped, tag = 'scoped memory for tpu_custom_call.1']
    #allocation5 [shape = 'u8[8192]{0}', space=vmem, size = 0x2000, scoped, tag = 'input window, operand 1, single buffered']
    #allocation6 [shape = 's32[1]{0}', space=sflag, size = 0x4, scoped, tag = 'scoped memory for tpu_custom_call.1']
    #allocation7 [shape = 'u8[8192]{0}', space=vmem, size = 0x2000, scoped, tag = 'output window, operand 0, single buffered']
    %8 = vsyncpa [#allocation3], 0
    %9 = vsyncpa [#allocation6], 0
    %10 = vsyncpa [#allocation4], 0
    // Predicated region
    $region2: #{tpu_custom_call.1} parent=1 // pred_check
      _
    $region3: #{tpu_custom_call.1} parent=1 // pred_check_branch
      %12 = sbr.rel (0) target = $region5
    $region4: #{tpu_custom_call.1} parent=1 // pred_region
      %s14 = ssub.s32 128, 128
      %15 = vsyncadd [#allocation3], %s14
      %s16 = sshll.u32 [#allocation2], 4
      %s17 = int_to_ptr.vmem [resolvable:$true] %s16
      %22 = dma.hbm_to_vmem [thread:$0]  %s0, 128, %s17, [#allocation3], 64, 64, 4
    $region5: #{tpu_custom_call.1} parent=1 // pred_fallthru
      _
    // Predicated region
    $region6: #{tpu_custom_call.1} parent=1 // pred_check
      _
    $region7: #{tpu_custom_call.1} parent=1 // pred_check_branch
      %24 = sbr.rel (0) target = $region9
    $region8: #{tpu_custom_call.1} parent=1 // pred_region
      %s26 = ssub.s32 256, 256
      %27 = vsyncadd [#allocation6], %s26
      %s28 = sshll.u32 [#allocation5], 4
      %s29 = int_to_ptr.vmem [resolvable:$true] %s28
      %34 = dma.hbm_to_vmem [thread:$0]  %s1, 256, %s29, [#allocation6], 64, 64, 4
    $region9: #{tpu_custom_call.1} parent=1 // pred_fallthru
      _
    // Predicated region
    $region10: #{tpu_custom_call.1} parent=1 // pred_check
      _
    $region11: #{tpu_custom_call.1} parent=1 // pred_check_branch
      %36 = sbr.rel (0) target = $region13
    $region12: #{tpu_custom_call.1} parent=1 // pred_region
      _
    $region13: #{tpu_custom_call.1} parent=1 // pred_fallthru
      _
    // Predicated region
    $region14: #{tpu_custom_call.1} parent=1 // pred_check
      _
    $region15: #{tpu_custom_call.1} parent=1 // pred_check_branch
      %38 = sbr.rel (0) target = $region17
    $region16: #{tpu_custom_call.1} parent=1 // pred_region
      %39 = dma.done [#allocation3], 128
    $region17: #{tpu_custom_call.1} parent=1 // pred_fallthru
      _
    // Predicated region
    $region18: #{tpu_custom_call.1} parent=1 // pred_check
      _
    $region19: #{tpu_custom_call.1} parent=1 // pred_check_branch
      %41 = sbr.rel (0) target = $region21
    $region20: #{tpu_custom_call.1} parent=1 // pred_region
      %42 = dma.done [#allocation6], 256
    $region21: #{tpu_custom_call.1} parent=1 // pred_fallthru
      _
    %v44 = vld [vmem:[#allocation2] sm:$0xf]
    %v45 = vld [vmem:[#allocation2 + $0x4] sm:$0xf]
    %v46 = vld [vmem:[#allocation5] sm:$0xf]
    %v47 = vld [vmem:[#allocation5 + $0x4] sm:$0xf]
    %v48 = vld [vmem:[#allocation5 + $0x8] sm:$0xf]
    %v49 = vld [vmem:[#allocation5 + $0xc] sm:$0xf]
    %v50 = vld [vmem:[%s2] sm:$0x1]
    %v52 = vlaneseq
    %v53 = vshrl.u32 %v52, 7
    %v54 = vsub.s32 0, %v53
    %v55 = vrot.slane %v50, %v54
    %v59 = vunpack.c.l.b16 %v44
    %v60 = vunpack.c.l.b16 %v45
    %v61 = vpack.c.b16 %v60, %v59
    %v66 = vunpack.c.l.b16 %v46
    %v67 = vunpack.c.l.b16 %v47
    %v68 = vunpack.c.l.b16 %v48
    %v69 = vunpack.c.l.b16 %v49
    %v70 = vpack.c.b16 %v67, %v66
    %v71 = vpack.c.b16 %v69, %v68
    %vm74 = vcmask 261120
    %v76 = vsel %vm74, %v61, 0
    %78 = vmatprep.subr.bf16.mxu0 0
    %79 = vmatpush1.bf16.msra.mxu0 %v70
    %80 = vmatprep.subr.bf16.mxu0 0
    %81 = vmatpush1.bf16.msra.mxu0 %v71
    %82 = vmatprep.subr.bf16.mxu0 0
    %83 = vmatpush1.bf16.msra.mxu0 0
    %84 = vmatprep.subr.bf16.mxu0 0
    %85 = vmatpush1.bf16.msra.mxu0 0
    %86 = vmatprep.subr.bf16.mxu0 0
    %87 = vmatpush1.bf16.msra.mxu0 0
    %88 = vmatprep.subr.bf16.mxu0 0
    %89 = vmatpush1.bf16.msra.mxu0 0
    %90 = vmatprep.subr.bf16.mxu0 0
    %91 = vmatpush1.bf16.msra.mxu0 0
    %92 = vmatprep.subr.bf16.mxu0 0
    %93 = vmatpush1.bf16.msra.mxu0 0
    %94 = vmatprep.subr.bf16.mxu0 0
    %95 = vmatpush1.bf16.msra.mxu0 0
    %96 = vmatprep.subr.bf16.mxu0 0
    %97 = vmatpush1.bf16.msra.mxu0 0
    %98 = vmatprep.subr.bf16.mxu0 0
    %99 = vmatpush1.bf16.msra.mxu0 0
    %100 = vmatprep.subr.bf16.mxu0 0
    %101 = vmatpush1.bf16.msra.mxu0 0
    %102 = vmatprep.subr.bf16.mxu0 0
    %103 = vmatpush1.bf16.msra.mxu0 0
    %104 = vmatprep.subr.bf16.mxu0 0
    %105 = vmatpush1.bf16.msra.mxu0 0
    %106 = vmatprep.subr.bf16.mxu0 0
    %107 = vmatpush1.bf16.msra.mxu0 0
    %108 = vmatprep.subr.bf16.mxu0 0
    %109 = vmatpush1.bf16.msra.mxu0 0
    %110 = vmatprep.mubr.bf16.mxu0 0
    %111 = vmatmul.mubr.bf16.gmra.mrb[0].mxu0 %v76
    %v112 = vpop.f32.mrb[0].mxu0
    %v113 = vadd.f32 %v55, %v112
    %v114 = vpop.f32.mrb[0].mxu0
    %v115 = vpop.f32.mrb[0].mxu0
    %v116 = vadd.f32 %v55, %v115
    %v117 = vpop.f32.mrb[0].mxu0
    %118 = vdwg.mxu0
    %v119 = vmul.f32 %v113, 0.5
    %v120 = vmul.f32 %v116, 0.5
    %v121 = vmul.f32 %v113, 0.70710677
    %v122 = vmul.f32 %v116, 0.70710677
    %v123 = verf.f32.pop %v121
    %v124 = verf.f32.pop %v122
    %v125 = vadd.f32 %v123, 1.0
    %v126 = vadd.f32 %v124, 1.0
    %v127 = vmul.f32 %v119, %v125
    %v128 = vmul.f32 %v120, %v126
    %129 = vst [vmem:[#allocation7] sm:$0xff] %v127
    %130 = vst [vmem:[#allocation7 + $0x8] sm:$0xff] %v128
    // Predicated region
    $region22: #{tpu_custom_call.1} parent=1 // pred_check
      _
    $region23: #{tpu_custom_call.1} parent=1 // pred_check_branch
      %132 = sbr.rel (0) target = $region25
    $region24: #{tpu_custom_call.1} parent=1 // pred_region
      %s134 = ssub.s32 256, 256
      %135 = vsyncadd [#allocation4], %s134
      %s136 = sshll.u32 [#allocation7], 4
      %s137 = int_to_ptr.vmem [resolvable:$true] %s136
      %142 = dma.vmem_to_hbm [thread:$0]  %s137, 256, %s3, [#allocation4], 128, 128, 8
    $region25: #{tpu_custom_call.1} parent=1 // pred_fallthru
      _
    // Predicated region
    $region26: #{tpu_custom_call.1} parent=1 // pred_check
      _
    $region27: #{tpu_custom_call.1} parent=1 // pred_check_branch
      %144 = sbr.rel (0) target = $region29
    $region28: #{tpu_custom_call.1} parent=1 // pred_region
      %145 = dma.done [#allocation4], 256
    $region29: #{tpu_custom_call.1} parent=1 // pred_fallthru
      _
    %146 = vsyncpa [#allocation3], 1
    %147 = vsyncpa [#allocation6], 1
    %148 = vsyncpa [#allocation4], 1

</llo_original>
